<compile_context>
chip_gen: v7x
topology: tpu7x:2x2x1
jax: 0.10.0
libtpu: 0.0.40
codegen_flags: <defaults>
</compile_context>

<pallas_src>
import functools
import math

import jax
import jax.numpy as jnp
from jax.experimental import pallas as pl
from jax.experimental.pallas import tpu as pltpu


def _round_up(x, m):
    return ((x + m - 1) // m) * m


def _nbytes(shape, dtype):
    return math.prod(shape) * jnp.dtype(dtype).itemsize


def gvae_forward_kernel(a_ref, e_ref, f_ref, eps_ref,
                        w1a_ref, w1e_ref, w1f_ref, b1_ref,
                        w2_ref, b2_ref,
                        w1d_ref, b1d_ref, w2d_ref, b2d_ref,
                        pred_ref, ml_ref, *, z_dim):
    f32 = jnp.float32
    bf16 = jnp.bfloat16

    # ---- encoder layer 1: relu(a@Wa + e@We + f@Wf + b1) ------------------
    # inputs arrive f32 (no XLA-side cast pre-pass); cast on the VPU here and
    # run three bf16 MXU dots with f32 accumulation (replaces concat @ W1).
    h = jnp.dot(a_ref[...].astype(bf16), w1a_ref[...], preferred_element_type=f32)
    h = h + jnp.dot(e_ref[...].astype(bf16), w1e_ref[...], preferred_element_type=f32)
    h = h + jnp.dot(f_ref[...].astype(bf16), w1f_ref[...], preferred_element_type=f32)
    h = jnp.maximum(h + b1_ref[...], 0.0)          # f32 bias + ReLU on VPU

    # ---- encoder layer 2: merged mean|logvar dot, kept in f32 ------------
    # K = h_pad, N = 2*z_dim -> MXU has huge slack; f32 keeps mean/logvar
    # tight since logvar error is amplified by exp(0.5*logvar) below.
    ml = jnp.dot(h, w2_ref[...], preferred_element_type=f32) + b2_ref[...]
    mean = ml[:, :z_dim]
    logvar = ml[:, z_dim:]

    # ---- reparameterization trick (f32: EUP exp + VPU fma) ---------------
    z = eps_ref[...] * jnp.exp(0.5 * logvar) + mean

    # ---- decoder layer 1: z_dim is tiny -> VPU broadcast-FMA outer product
    # TODO(synk): if z_dim ever grows to >= 8, switch back to a single MXU dot.
    w1d = w1d_ref[...]
    hd = z[:, 0:1] * w1d[0:1, :]
    for k in range(1, z_dim):
        hd = hd + z[:, k:k + 1] * w1d[k:k + 1, :]
    hd = jnp.maximum(hd + b1d_ref[...], 0.0)

    # ---- decoder layer 2 (bf16 MXU dot), lane-dense bf16 padded store ----
    pred = jnp.dot(hd.astype(bf16), w2d_ref[...],
                   preferred_element_type=f32) + b2d_ref[...]

    pred_ref[...] = pred.astype(pred_ref.dtype)     # bf16 output stream
    ml_ref[...] = ml                                # f32 mean|logvar


def gvae_forward(A, E, F, params, eps, *, n, n_e, n_r, z_dim):
    """GVAE forward pass. Returns ((A_hat, E_hat, F_hat), mean, logvar).

    A_hat/E_hat/F_hat are returned in bfloat16 (the kernel stores the padded
    flat prediction lane-dense in bf16 to cut output HBM traffic); mean/logvar
    stay float32 for the reparameterization / KL path.
    """
    w_enc1, b_enc1, w_enc2, b_enc2, w_dec1, b_dec1, w_dec2, b_dec2 = params
    B = A.shape[0]
    a_dim = n * n
    e_dim = n * n * n_r
    f_dim = n * n_e
    input_dim = a_dim + e_dim + f_dim
    h_dim = w_enc1.shape[1]

    # padded feature sizes (MXU / (8,128)-tile friendly)
    h_pad = _round_up(h_dim, 128)
    in_pad = _round_up(input_dim, 128)

    # ---- batch tiling -----------------------------------------------------
    # Big tiles amortize the ~0.35us per-grid-step overhead (this kernel is
    # HBM/overhead-bound, not MXU-bound).  When B is large, keep >= 2 grid
    # steps so dimension_semantics=("parallel",) can split across v7x's 2 TCs.
    # Partial last blocks are handled by Pallas (no batch-padding pre-pass).
    TB_CAP = 512
    if B <= 8:
        TB = B                      # block dim == full batch dim (allowed)
    else:
        TB = min(TB_CAP, _round_up(pl.cdiv(B, 2), 8))
    grid = (pl.cdiv(B, TB),)

    # ---- glue: flatten graphs (no pad / cast pre-pass over the batch) -----
    a = A.reshape(B, a_dim).astype(jnp.float32)
    e = E.reshape(B, e_dim).astype(jnp.float32)
    f = F.reshape(B, f_dim).astype(jnp.float32)
    eps_p = eps.astype(jnp.float32)

    def pad2(w, rows, cols):
        return jnp.pad(w, ((0, rows - w.shape[0]), (0, cols - w.shape[1])))

    # encoder layer 1: row-split along [a | e | f], columns zero-padded to h_pad
    w1a = pad2(w_enc1[:a_dim], a_dim, h_pad).astype(jnp.bfloat16)
    w1e = pad2(w_enc1[a_dim:a_dim + e_dim], e_dim, h_pad).astype(jnp.bfloat16)
    w1f = pad2(w_enc1[a_dim + e_dim:], f_dim, h_pad).astype(jnp.bfloat16)
    b1 = pad2(b_enc1, 1, h_pad)                               # f32
    # encoder layer 2: merged mean|logvar weight (stays f32)
    w2 = pad2(w_enc2, h_pad, 2 * z_dim)
    b2 = b_enc2
    # decoder
    w1d = pad2(w_dec1, z_dim, h_pad)                          # f32 (VPU path)
    b1d = pad2(b_dec1, 1, h_pad)
    w2d = pad2(w_dec2, h_pad, in_pad).astype(jnp.bfloat16)
    b2d = pad2(b_dec2, 1, in_pad)

    def batched(d):
        return pl.BlockSpec((TB, d), lambda i: (i, 0))

    def resident(shape):
        # Whole-array weight block, same for every grid step (VMEM-resident).
        # TODO(synk): single-buffer these (pipeline_mode=pl.Buffered(1)) once
        # h_dim/input_dim grow enough to pressure v7x's 64 MiB VMEM.
        return pl.BlockSpec(shape, lambda i: (0, 0))

    in_specs = [
        batched(a_dim), batched(e_dim), batched(f_dim), batched(z_dim),
        resident((a_dim, h_pad)), resident((e_dim, h_pad)),
        resident((f_dim, h_pad)), resident((1, h_pad)),
        resident((h_pad, 2 * z_dim)), resident((1, 2 * z_dim)),
        resident((z_dim, h_pad)), resident((1, h_pad)),
        resident((h_pad, in_pad)), resident((1, in_pad)),
    ]
    out_specs = (batched(in_pad), batched(2 * z_dim))
    out_shape = (
        jax.ShapeDtypeStruct((B, in_pad), jnp.bfloat16),    # flat pred (bf16)
        jax.ShapeDtypeStruct((B, 2 * z_dim), jnp.float32),  # mean | logvar
    )

    # ---- VMEM budget: generation-aware clamp ------------------------------
    batched_bytes = (_nbytes((TB, a_dim), jnp.float32)
                     + _nbytes((TB, e_dim), jnp.float32)
                     + _nbytes((TB, f_dim), jnp.float32)
                     + _nbytes((TB, z_dim), jnp.float32)
                     + _nbytes((TB, in_pad), jnp.bfloat16)
                     + _nbytes((TB, 2 * z_dim), jnp.float32))
    weight_bytes = sum(_nbytes(w.shape, w.dtype)
                       for w in (w1a, w1e, w1f, b1, w2, b2,
                                 w1d, b1d, w2d, b2d))
    try:
        vmem_cap = int(pltpu.get_tpu_info().vmem_capacity_bytes)
    except Exception:                      # info query unavailable -> be safe
        vmem_cap = 64 << 20                # v7x-sized conservative fallback
    needed = 2 * (batched_bytes + weight_bytes) + (8 << 20)
    vmem_limit = int(min(max(needed, 32 << 20), (vmem_cap * 3) // 4))

    kernel = functools.partial(gvae_forward_kernel, z_dim=z_dim)
    pred, ml = pl.pallas_call(
        kernel,
        grid=grid,
        in_specs=in_specs,
        out_specs=out_specs,
        out_shape=out_shape,
        compiler_params=pltpu.CompilerParams(
            dimension_semantics=("parallel",),
            vmem_limit_bytes=vmem_limit),
    )(a, e, f, eps_p, w1a, w1e, w1f, b1, w2, b2, w1d, b1d, w2d, b2d)

    # ---- glue: strip lane padding, GVAE.reconstruct ------------------------
    pred = pred[:, :input_dim]
    mean = ml[:, :z_dim]
    logvar = ml[:, z_dim:]
    delimit_a = a_dim
    delimit_e = a_dim + e_dim
    A_hat = pred[:, :delimit_a].reshape(B, n, n)
    E_hat = pred[:, delimit_a:delimit_e].reshape(B, n, n, n_r)
    F_hat = pred[:, delimit_e:].reshape(B, n, n_e)
    return (A_hat, E_hat, F_hat), mean, logvar


def _xavier_uniform(key, fan_in, fan_out, gain=0.01):
    bound = gain * jnp.sqrt(6.0 / (fan_in + fan_out))
    return jax.random.uniform(key, (fan_in, fan_out), jnp.float32, -bound, bound)


def _linear_bias(key, fan_in, fan_out):
    # PyTorch nn.Linear default bias init: U(-1/sqrt(fan_in), 1/sqrt(fan_in))
    bound = 1.0 / jnp.sqrt(jnp.asarray(fan_in, jnp.float32))
    return jax.random.uniform(key, (1, fan_out), jnp.float32, -bound, bound)


def make_params(key, input_dim, h_dim, z_dim):
    ks = jax.random.split(key, 8)
    # encoder: input_dim -> h_dim -> 2*z_dim
    w1e = _xavier_uniform(ks[0], input_dim, h_dim)
    b1e = _linear_bias(ks[1], input_dim, h_dim)
    w2e = _xavier_uniform(ks[2], h_dim, 2 * z_dim)
    b2e = _linear_bias(ks[3], h_dim, 2 * z_dim)
    # decoder: z_dim -> h_dim -> input_dim
    w1d = _xavier_uniform(ks[4], z_dim, h_dim)
    b1d = _linear_bias(ks[5], z_dim, h_dim)
    w2d = _xavier_uniform(ks[6], h_dim, input_dim)
    b2d = _linear_bias(ks[7], h_dim, input_dim)
    return (w1e, b1e, w2e, b2e, w1d, b1d, w2d, b2d)


def reference_forward(x, eps, params, z_dim):
    """Pure-JAX f32 reference with the exact torch ordering/semantics."""
    w1e, b1e, w2e, b2e, w1d, b1d, w2d, b2d = params
    h = jnp.maximum(x @ w1e + b1e, 0.0)
    enc = h @ w2e + b2e
    mean, logvar = enc[:, :z_dim], enc[:, z_dim:]
    z = eps * jnp.exp(0.5 * logvar) + mean
    hd = jnp.maximum(z @ w1d + b1d, 0.0)
    pred = hd @ w2d + b2d
    return pred, mean, logvar


if __name__ == "__main__":
    # small config consistent with GVAE.__init__
    args_n = 4                  # args['n']
    n = args_n * 2              # self.n = args['n'] * 2
    n_e = 4                     # node attributes
    n_r = 3                     # edge attributes
    h_dim = 32
    z_dim = 2
    B = 2
    input_dim = n * n + n * n_e + n * n * n_r   # 64 + 32 + 192 = 288

    key = jax.random.PRNGKey(0)
    k_a, k_e, k_f, k_eps, k_p = jax.random.split(key, 5)

    A = (jax.random.uniform(k_a, (B, n, n)) > 0.5).astype(jnp.float32)
    E = jax.random.uniform(k_e, (B, n, n, n_r), jnp.float32)
    F = jax.random.uniform(k_f, (B, n, n_e), jnp.float32)
    eps = jax.random.normal(k_eps, (B, z_dim), jnp.float32)

    params = make_params(k_p, input_dim, h_dim, z_dim)

    (A_hat, E_hat, F_hat), mean, logvar = gvae_forward(
        A, E, F, params, eps, n=n, n_e=n_e, n_r=n_r, z_dim=z_dim)
    jax.block_until_ready((A_hat, E_hat, F_hat, mean, logvar))

    # shapes
    assert A_hat.shape == (B, n, n)
    assert E_hat.shape == (B, n, n, n_r)
    assert F_hat.shape == (B, n, n_e)
    assert mean.shape == (B, z_dim) and logvar.shape == (B, z_dim)

    # numerics vs pure-f32 reference:
    #  - pred uses bf16 MXU operands + bf16 storage (f32 accumulation)
    #  - mean/logvar go through an f32 layer-2 dot and stay tight
    x_flat = jnp.concatenate(
        [A.reshape(B, -1), E.reshape(B, -1), F.reshape(B, -1)], axis=1)
    pred_ref, mean_ref, logvar_ref = reference_forward(x_flat, eps, params, z_dim)
    pred_kernel = jnp.concatenate(
        [A_hat.reshape(B, -1), E_hat.reshape(B, -1), F_hat.reshape(B, -1)],
        axis=1).astype(jnp.float32)
    assert jnp.allclose(pred_kernel, pred_ref, atol=4e-3, rtol=2e-2)
    assert jnp.allclose(mean, mean_ref, atol=1e-3, rtol=1e-2)
    assert jnp.allclose(logvar, logvar_ref, atol=1e-3, rtol=1e-2)

    print("KERNEL_OK")
</pallas_src>

<mosaic_0001>
module attributes {stable_mosaic.version = 11 : i64} {
  func.func @gvae_forward_kernel(%arg0: i32, %arg1: memref<2x64xf32, #tpu.memory_space<vmem>>, %arg2: memref<2x192xf32, #tpu.memory_space<vmem>>, %arg3: memref<2x32xf32, #tpu.memory_space<vmem>>, %arg4: memref<2x2xf32, #tpu.memory_space<vmem>>, %arg5: memref<64x128xbf16, #tpu.memory_space<vmem>>, %arg6: memref<192x128xbf16, #tpu.memory_space<vmem>>, %arg7: memref<32x128xbf16, #tpu.memory_space<vmem>>, %arg8: memref<1x128xf32, #tpu.memory_space<vmem>>, %arg9: memref<128x4xf32, #tpu.memory_space<vmem>>, %arg10: memref<1x4xf32, #tpu.memory_space<vmem>>, %arg11: memref<2x128xf32, #tpu.memory_space<vmem>>, %arg12: memref<1x128xf32, #tpu.memory_space<vmem>>, %arg13: memref<128x384xbf16, #tpu.memory_space<vmem>>, %arg14: memref<1x384xf32, #tpu.memory_space<vmem>>, %arg15: memref<2x384xbf16, #tpu.memory_space<vmem>>, %arg16: memref<2x4xf32, #tpu.memory_space<vmem>>) attributes {dimension_semantics = [#tpu.dimension_semantics<parallel>], iteration_bounds = array<i64: 1>, scalar_prefetch = 0 : i64, scratch_operands = 0 : i64, tpu.core_type = #tpu.core_type<tc>, window_params = [{transform_indices = @transform_0, window_bounds = array<i64: 2, 64>}, {transform_indices = @transform_1, window_bounds = array<i64: 2, 192>}, {transform_indices = @transform_2, window_bounds = array<i64: 2, 32>}, {transform_indices = @transform_3, window_bounds = array<i64: 2, 2>}, {pipeline_mode = #tpu.pipeline_mode<synchronous>, transform_indices = @transform_4, window_bounds = array<i64: 64, 128>}, {pipeline_mode = #tpu.pipeline_mode<synchronous>, transform_indices = @transform_5, window_bounds = array<i64: 192, 128>}, {pipeline_mode = #tpu.pipeline_mode<synchronous>, transform_indices = @transform_6, window_bounds = array<i64: 32, 128>}, {pipeline_mode = #tpu.pipeline_mode<synchronous>, transform_indices = @transform_7, window_bounds = array<i64: 1, 128>}, {pipeline_mode = #tpu.pipeline_mode<synchronous>, transform_indices = @transform_8, window_bounds = array<i64: 128, 4>}, {pipeline_mode = #tpu.pipeline_mode<synchronous>, transform_indices = @transform_9, window_bounds = array<i64: 1, 4>}, {pipeline_mode = #tpu.pipeline_mode<synchronous>, transform_indices = @transform_10, window_bounds = array<i64: 2, 128>}, {pipeline_mode = #tpu.pipeline_mode<synchronous>, transform_indices = @transform_11, window_bounds = array<i64: 1, 128>}, {pipeline_mode = #tpu.pipeline_mode<synchronous>, transform_indices = @transform_12, window_bounds = array<i64: 128, 384>}, {pipeline_mode = #tpu.pipeline_mode<synchronous>, transform_indices = @transform_13, window_bounds = array<i64: 1, 384>}, {transform_indices = @transform_14, window_bounds = array<i64: 2, 384>}, {transform_indices = @transform_15, window_bounds = array<i64: 2, 4>}]} {
    %c0 = arith.constant 0 : index
    %c0_0 = arith.constant 0 : index
    %0 = vector.load %arg1[%c0, %c0_0] : memref<2x64xf32, #tpu.memory_space<vmem>>, vector<2x64xf32>
    %1 = arith.truncf %0 : vector<2x64xf32> to vector<2x64xbf16>
    %c0_1 = arith.constant 0 : index
    %c0_2 = arith.constant 0 : index
    %2 = vector.load %arg5[%c0_1, %c0_2] : memref<64x128xbf16, #tpu.memory_space<vmem>>, vector<64x128xbf16>
    %cst = arith.constant dense<0.000000e+00> : vector<2x128xf32>
    %3 = tpu.matmul %1, %2, %cst {dimension_numbers = #tpu.dot_dimension_numbers<[1], [0], [0], [1], [0, 0, 1, 1], [], []>} : vector<2x64xbf16>, vector<64x128xbf16>, vector<2x128xf32> -> vector<2x128xf32>
    %c0_3 = arith.constant 0 : index
    %c0_4 = arith.constant 0 : index
    %4 = vector.load %arg2[%c0_3, %c0_4] : memref<2x192xf32, #tpu.memory_space<vmem>>, vector<2x192xf32>
    %5 = arith.truncf %4 : vector<2x192xf32> to vector<2x192xbf16>
    %c0_5 = arith.constant 0 : index
    %c0_6 = arith.constant 0 : index
    %6 = vector.load %arg6[%c0_5, %c0_6] : memref<192x128xbf16, #tpu.memory_space<vmem>>, vector<192x128xbf16>
    %cst_7 = arith.constant dense<0.000000e+00> : vector<2x128xf32>
    %7 = tpu.matmul %5, %6, %cst_7 {dimension_numbers = #tpu.dot_dimension_numbers<[1], [0], [0], [1], [0, 0, 1, 1], [], []>} : vector<2x192xbf16>, vector<192x128xbf16>, vector<2x128xf32> -> vector<2x128xf32>
    %8 = arith.addf %3, %7 : vector<2x128xf32>
    %c0_8 = arith.constant 0 : index
    %c0_9 = arith.constant 0 : index
    %9 = vector.load %arg3[%c0_8, %c0_9] : memref<2x32xf32, #tpu.memory_space<vmem>>, vector<2x32xf32>
    %10 = arith.truncf %9 : vector<2x32xf32> to vector<2x32xbf16>
    %c0_10 = arith.constant 0 : index
    %c0_11 = arith.constant 0 : index
    %11 = vector.load %arg7[%c0_10, %c0_11] : memref<32x128xbf16, #tpu.memory_space<vmem>>, vector<32x128xbf16>
    %cst_12 = arith.constant dense<0.000000e+00> : vector<2x128xf32>
    %12 = tpu.matmul %10, %11, %cst_12 {dimension_numbers = #tpu.dot_dimension_numbers<[1], [0], [0], [1], [0, 0, 1, 1], [], []>} : vector<2x32xbf16>, vector<32x128xbf16>, vector<2x128xf32> -> vector<2x128xf32>
    %13 = arith.addf %8, %12 : vector<2x128xf32>
    %c0_13 = arith.constant 0 : index
    %c0_14 = arith.constant 0 : index
    %14 = vector.load %arg8[%c0_13, %c0_14] : memref<1x128xf32, #tpu.memory_space<vmem>>, vector<1x128xf32>
    %15 = vector.broadcast %14 : vector<1x128xf32> to vector<2x128xf32>
    %16 = arith.addf %13, %15 : vector<2x128xf32>
    %cst_15 = arith.constant 0.000000e+00 : f32
    %17 = vector.broadcast %cst_15 : f32 to vector<2x128xf32>
    %18 = arith.maximumf %16, %17 : vector<2x128xf32>
    %c0_16 = arith.constant 0 : index
    %c0_17 = arith.constant 0 : index
    %19 = vector.load %arg9[%c0_16, %c0_17] : memref<128x4xf32, #tpu.memory_space<vmem>>, vector<128x4xf32>
    %cst_18 = arith.constant dense<0.000000e+00> : vector<2x4xf32>
    %20 = tpu.matmul %18, %19, %cst_18 {dimension_numbers = #tpu.dot_dimension_numbers<[1], [0], [0], [1], [0, 0, 1, 1], [], []>} : vector<2x128xf32>, vector<128x4xf32>, vector<2x4xf32> -> vector<2x4xf32>
    %c0_19 = arith.constant 0 : index
    %c0_20 = arith.constant 0 : index
    %21 = vector.load %arg10[%c0_19, %c0_20] : memref<1x4xf32, #tpu.memory_space<vmem>>, vector<1x4xf32>
    %22 = vector.broadcast %21 : vector<1x4xf32> to vector<2x4xf32>
    %23 = arith.addf %20, %22 : vector<2x4xf32>
    %24 = vector.extract_strided_slice %23 {offsets = [0, 0], sizes = [2, 2], strides = [1, 1]} : vector<2x4xf32> to vector<2x2xf32>
    %25 = vector.extract_strided_slice %23 {offsets = [0, 2], sizes = [2, 2], strides = [1, 1]} : vector<2x4xf32> to vector<2x2xf32>
    %c0_21 = arith.constant 0 : index
    %c0_22 = arith.constant 0 : index
    %26 = vector.load %arg4[%c0_21, %c0_22] : memref<2x2xf32, #tpu.memory_space<vmem>>, vector<2x2xf32>
    %cst_23 = arith.constant 5.000000e-01 : f32
    %27 = vector.broadcast %cst_23 : f32 to vector<2x2xf32>
    %28 = arith.mulf %27, %25 : vector<2x2xf32>
    %29 = math.exp %28 : vector<2x2xf32>
    %30 = arith.mulf %26, %29 : vector<2x2xf32>
    %31 = arith.addf %30, %24 : vector<2x2xf32>
    %c0_24 = arith.constant 0 : index
    %c0_25 = arith.constant 0 : index
    %32 = vector.load %arg11[%c0_24, %c0_25] : memref<2x128xf32, #tpu.memory_space<vmem>>, vector<2x128xf32>
    %33 = vector.extract_strided_slice %31 {offsets = [0, 0], sizes = [2, 1], strides = [1, 1]} : vector<2x2xf32> to vector<2x1xf32>
    %34 = vector.extract_strided_slice %32 {offsets = [0, 0], sizes = [1, 128], strides = [1, 1]} : vector<2x128xf32> to vector<1x128xf32>
    %35 = vector.broadcast %33 : vector<2x1xf32> to vector<2x128xf32>
    %36 = vector.broadcast %34 : vector<1x128xf32> to vector<2x128xf32>
    %37 = arith.mulf %35, %36 : vector<2x128xf32>
    %38 = vector.extract_strided_slice %31 {offsets = [0, 1], sizes = [2, 1], strides = [1, 1]} : vector<2x2xf32> to vector<2x1xf32>
    %39 = vector.extract_strided_slice %32 {offsets = [1, 0], sizes = [1, 128], strides = [1, 1]} : vector<2x128xf32> to vector<1x128xf32>
    %40 = vector.broadcast %38 : vector<2x1xf32> to vector<2x128xf32>
    %41 = vector.broadcast %39 : vector<1x128xf32> to vector<2x128xf32>
    %42 = arith.mulf %40, %41 : vector<2x128xf32>
    %43 = arith.addf %37, %42 : vector<2x128xf32>
    %c0_26 = arith.constant 0 : index
    %c0_27 = arith.constant 0 : index
    %44 = vector.load %arg12[%c0_26, %c0_27] : memref<1x128xf32, #tpu.memory_space<vmem>>, vector<1x128xf32>
    %45 = vector.broadcast %44 : vector<1x128xf32> to vector<2x128xf32>
    %46 = arith.addf %43, %45 : vector<2x128xf32>
    %cst_28 = arith.constant 0.000000e+00 : f32
    %47 = vector.broadcast %cst_28 : f32 to vector<2x128xf32>
    %48 = arith.maximumf %46, %47 : vector<2x128xf32>
    %49 = arith.truncf %48 : vector<2x128xf32> to vector<2x128xbf16>
    %c0_29 = arith.constant 0 : index
    %c0_30 = arith.constant 0 : index
    %50 = vector.load %arg13[%c0_29, %c0_30] : memref<128x384xbf16, #tpu.memory_space<vmem>>, vector<128x384xbf16>
    %cst_31 = arith.constant dense<0.000000e+00> : vector<2x384xf32>
    %51 = tpu.matmul %49, %50, %cst_31 {dimension_numbers = #tpu.dot_dimension_numbers<[1], [0], [0], [1], [0, 0, 1, 1], [], []>} : vector<2x128xbf16>, vector<128x384xbf16>, vector<2x384xf32> -> vector<2x384xf32>
    %c0_32 = arith.constant 0 : index
    %c0_33 = arith.constant 0 : index
    %52 = vector.load %arg14[%c0_32, %c0_33] : memref<1x384xf32, #tpu.memory_space<vmem>>, vector<1x384xf32>
    %53 = vector.broadcast %52 : vector<1x384xf32> to vector<2x384xf32>
    %54 = arith.addf %51, %53 : vector<2x384xf32>
    %55 = arith.truncf %54 : vector<2x384xf32> to vector<2x384xbf16>
    %c0_34 = arith.constant 0 : index
    %c0_35 = arith.constant 0 : index
    %56 = vector.load %arg15[%c0_34, %c0_35] : memref<2x384xbf16, #tpu.memory_space<vmem>>, vector<2x384xbf16>
    tpu.vector_store %arg15[%c0_34, %c0_35], %55 {strides = array<i32>} : memref<2x384xbf16, #tpu.memory_space<vmem>>, vector<2x384xbf16>,
    %c0_36 = arith.constant 0 : index
    %c0_37 = arith.constant 0 : index
    %57 = vector.load %arg16[%c0_36, %c0_37] : memref<2x4xf32, #tpu.memory_space<vmem>>, vector<2x4xf32>
    tpu.vector_store %arg16[%c0_36, %c0_37], %23 {strides = array<i32>} : memref<2x4xf32, #tpu.memory_space<vmem>>, vector<2x4xf32>,
    return
  }
  func.func @transform_0(%arg0: i32) -> (i32, i32) {
    %c0_i32 = arith.constant 0 : i32
    %c0_i32_0 = arith.constant 0 : i32
    return %arg0, %c0_i32 : i32, i32
  }
  func.func @transform_1(%arg0: i32) -> (i32, i32) {
    %c0_i32 = arith.constant 0 : i32
    %c0_i32_0 = arith.constant 0 : i32
    return %arg0, %c0_i32 : i32, i32
  }
  func.func @transform_2(%arg0: i32) -> (i32, i32) {
    %c0_i32 = arith.constant 0 : i32
    %c0_i32_0 = arith.constant 0 : i32
    return %arg0, %c0_i32 : i32, i32
  }
  func.func @transform_3(%arg0: i32) -> (i32, i32) {
    %c0_i32 = arith.constant 0 : i32
    %c0_i32_0 = arith.constant 0 : i32
    return %arg0, %c0_i32 : i32, i32
  }
  func.func @transform_4(%arg0: i32) -> (i32, i32) {
    %c0_i32 = arith.constant 0 : i32
    %c0_i32_0 = arith.constant 0 : i32
    %c0_i32_1 = arith.constant 0 : i32
    return %c0_i32, %c0_i32_0 : i32, i32
  }
  func.func @transform_5(%arg0: i32) -> (i32, i32) {
    %c0_i32 = arith.constant 0 : i32
    %c0_i32_0 = arith.constant 0 : i32
    %c0_i32_1 = arith.constant 0 : i32
    return %c0_i32, %c0_i32_0 : i32, i32
  }
  func.func @transform_6(%arg0: i32) -> (i32, i32) {
    %c0_i32 = arith.constant 0 : i32
    %c0_i32_0 = arith.constant 0 : i32
    %c0_i32_1 = arith.constant 0 : i32
    return %c0_i32, %c0_i32_0 : i32, i32
  }
  func.func @transform_7(%arg0: i32) -> (i32, i32) {
    %c0_i32 = arith.constant 0 : i32
    %c0_i32_0 = arith.constant 0 : i32
    %c0_i32_1 = arith.constant 0 : i32
    return %c0_i32, %c0_i32_0 : i32, i32
  }
  func.func @transform_8(%arg0: i32) -> (i32, i32) {
    %c0_i32 = arith.constant 0 : i32
    %c0_i32_0 = arith.constant 0 : i32
    %c0_i32_1 = arith.constant 0 : i32
    return %c0_i32, %c0_i32_0 : i32, i32
  }
  func.func @transform_9(%arg0: i32) -> (i32, i32) {
    %c0_i32 = arith.constant 0 : i32
    %c0_i32_0 = arith.constant 0 : i32
    %c0_i32_1 = arith.constant 0 : i32
    return %c0_i32, %c0_i32_0 : i32, i32
  }
  func.func @transform_10(%arg0: i32) -> (i32, i32) {
    %c0_i32 = arith.constant 0 : i32
    %c0_i32_0 = arith.constant 0 : i32
    %c0_i32_1 = arith.constant 0 : i32
    return %c0_i32, %c0_i32_0 : i32, i32
  }
  func.func @transform_11(%arg0: i32) -> (i32, i32) {
    %c0_i32 = arith.constant 0 : i32
    %c0_i32_0 = arith.constant 0 : i32
    %c0_i32_1 = arith.constant 0 : i32
    return %c0_i32, %c0_i32_0 : i32, i32
  }
  func.func @transform_12(%arg0: i32) -> (i32, i32) {
    %c0_i32 = arith.constant 0 : i32
    %c0_i32_0 = arith.constant 0 : i32
    %c0_i32_1 = arith.constant 0 : i32
    return %c0_i32, %c0_i32_0 : i32, i32
  }
  func.func @transform_13(%arg0: i32) -> (i32, i32) {
    %c0_i32 = arith.constant 0 : i32
    %c0_i32_0 = arith.constant 0 : i32
    %c0_i32_1 = arith.constant 0 : i32
    return %c0_i32, %c0_i32_0 : i32, i32
  }
  func.func @transform_14(%arg0: i32) -> (i32, i32) {
    %c0_i32 = arith.constant 0 : i32
    %c0_i32_0 = arith.constant 0 : i32
    return %arg0, %c0_i32 : i32, i32
  }
  func.func @transform_15(%arg0: i32) -> (i32, i32) {
    %c0_i32 = arith.constant 0 : i32
    %c0_i32_0 = arith.constant 0 : i32
    return %arg0, %c0_i32 : i32, i32
  }
}

</mosaic_0001>

<llo_original>
// kernel: tpu_custom_call.1
$region0: #{tpu_custom_call.1}
  #allocation0 [shape = 'u32[]', space=smem, size = 0x4, offset = 0x4, fixed_abs, tag = 'smem constant byte address 0x4 - core index']
  #allocation1 [shape = 'u32[144,128]{1,0:T(1,128)}', space=vmem, size = 0x12000, scoped, tag = 'internal scratch']
  %s0 = inlined_call_operand.vmem [shape: f32[2,64], index: 0, kind: input, shape index: {}]
  %s1 = inlined_call_operand.vmem [shape: f32[2,192], index: 1, kind: input, shape index: {}]
  %s2 = inlined_call_operand.hbm [shape: f32[2,32], index: 2, kind: input, shape index: {}]
  %s3 = inlined_call_operand.hbm [shape: f32[2,2], index: 3, kind: input, shape index: {}]
  %s4 = inlined_call_operand.vmem [shape: bf16[64,128], index: 4, kind: input, shape index: {}]
  %s5 = inlined_call_operand.vmem [shape: bf16[192,128], index: 5, kind: input, shape index: {}]
  %s6 = inlined_call_operand.vmem [shape: bf16[32,128], index: 6, kind: input, shape index: {}]
  %s7 = inlined_call_operand.vmem [shape: f32[1,128], index: 7, kind: input, shape index: {}]
  %s8 = inlined_call_operand.vmem [shape: f32[128,4], index: 8, kind: input, shape index: {}]
  %s9 = inlined_call_operand.vmem [shape: f32[1,4], index: 9, kind: input, shape index: {}]
  %s10 = inlined_call_operand.vmem [shape: f32[2,128], index: 10, kind: input, shape index: {}]
  %s11 = inlined_call_operand.vmem [shape: f32[1,128], index: 11, kind: input, shape index: {}]
  %s12 = inlined_call_operand.hbm [shape: bf16[128,384], index: 12, kind: input, shape index: {}]
  %s13 = inlined_call_operand.vmem [shape: f32[1,384], index: 13, kind: input, shape index: {}]
  %s14 = inlined_call_operand.hbm [shape: bf16[2,384], index: 14, kind: output, shape index: {0}]
  %s15 = inlined_call_operand.hbm [shape: f32[2,4], index: 15, kind: output, shape index: {1}]
  %16 = xla_tuple %s14, %s15
  %s17 = sld [smem:[#allocation0]]
  $region86: #{tpu_custom_call.1} parent=0
    _
  %s19 = ssub.s32 1, %s17
  %s20 = scalar_select 0, %s19, %s17
  $region1: #{tpu_custom_call.1} parent=0
    #allocation2 [shape = 'u8[1024]{0}', space=vmem, size = 0x400, scoped, tag = 'input window, operand 2, single buffered']
    #allocation3 [shape = 's32[1]{0}', space=sflag, size = 0x4, scoped, tag = 'scoped memory for tpu_custom_call.1']
    #allocation4 [shape = 's32[1]{0}', space=sflag, size = 0x4, scoped, tag = 'scoped memory for tpu_custom_call.1']
    #allocation5 [shape = 'u8[1024]{0}', space=vmem, size = 0x400, scoped, tag = 'input window, operand 3, single buffered']
    #allocation6 [shape = 's32[1]{0}', space=sflag, size = 0x4, scoped, tag = 'scoped memory for tpu_custom_call.1']
    #allocation7 [shape = 'u8[98304]{0}', space=vmem, size = 0x18000, scoped, tag = 'input window, operand 12, single buffered']
    #allocation8 [shape = 'u8[1536]{0}', space=vmem, size = 0x800, scoped, tag = 'output window, operand 0, single buffered']
    #allocation9 [shape = 'u8[1024]{0}', space=vmem, size = 0x400, scoped, tag = 'output window, operand 1, single buffered']
    #allocation10 [shape = 's32[1]{0}', space=sflag, size = 0x4, scoped, tag = 'scoped memory for tpu_custom_call.1']
    %21 = vsyncpa [#allocation3], 0
    %22 = vsyncpa [#allocation6], 0
    %23 = vsyncpa [#allocation4], 0
    %24 = vsyncpa [#allocation10], 0
    // Predicated region
    $region2: #{tpu_custom_call.1} parent=1 // pred_check
      _
    $region3: #{tpu_custom_call.1} parent=1 // pred_check_branch
      %26 = sbr.rel (0) target = $region5
    $region4: #{tpu_custom_call.1} parent=1 // pred_region
      _
    $region5: #{tpu_custom_call.1} parent=1 // pred_fallthru
      _
    // Predicated region
    $region6: #{tpu_custom_call.1} parent=1 // pred_check
      _
    $region7: #{tpu_custom_call.1} parent=1 // pred_check_branch
      %28 = sbr.rel (0) target = $region9
    $region8: #{tpu_custom_call.1} parent=1 // pred_region
      _
    $region9: #{tpu_custom_call.1} parent=1 // pred_fallthru
      _
    // Predicated region
    $region10: #{tpu_custom_call.1} parent=1 // pred_check
      _
    $region11: #{tpu_custom_call.1} parent=1 // pred_check_branch
      %30 = sbr.rel (0) target = $region13
    $region12: #{tpu_custom_call.1} parent=1 // pred_region
      %s32 = ssub.s32 32, 32
      %33 = vsyncadd [#allocation3], %s32
      %s35 = sshll.u32 [#allocation2], 4
      %s36 = int_to_ptr.vmem [resolvable:$true] %s35
      %38 = dma.hbm_to_vmem [thread:$0]  %s2, 32, %s36, [#allocation3]
    $region13: #{tpu_custom_call.1} parent=1 // pred_fallthru
      _
    // Predicated region
    $region14: #{tpu_custom_call.1} parent=1 // pred_check
      _
    $region15: #{tpu_custom_call.1} parent=1 // pred_check_branch
      %40 = sbr.rel (0) target = $region17
    $region16: #{tpu_custom_call.1} parent=1 // pred_region
      %s42 = ssub.s32 32, 32
      %43 = vsyncadd [#allocation6], %s42
      %s45 = sshll.u32 [#allocation5], 4
      %s46 = int_to_ptr.vmem [resolvable:$true] %s45
      %48 = dma.hbm_to_vmem [thread:$0]  %s3, 32, %s46, [#allocation6]
    $region17: #{tpu_custom_call.1} parent=1 // pred_fallthru
      _
    // Predicated region
    $region18: #{tpu_custom_call.1} parent=1 // pred_check
      _
    $region19: #{tpu_custom_call.1} parent=1 // pred_check_branch
      %50 = sbr.rel (0) target = $region21
    $region20: #{tpu_custom_call.1} parent=1 // pred_region
      _
    $region21: #{tpu_custom_call.1} parent=1 // pred_fallthru
      _
    // Predicated region
    $region22: #{tpu_custom_call.1} parent=1 // pred_check
      _
    $region23: #{tpu_custom_call.1} parent=1 // pred_check_branch
      %52 = sbr.rel (0) target = $region25
    $region24: #{tpu_custom_call.1} parent=1 // pred_region
      _
    $region25: #{tpu_custom_call.1} parent=1 // pred_fallthru
      _
    // Predicated region
    $region26: #{tpu_custom_call.1} parent=1 // pred_check
      _
    $region27: #{tpu_custom_call.1} parent=1 // pred_check_branch
      %54 = sbr.rel (0) target = $region29
    $region28: #{tpu_custom_call.1} parent=1 // pred_region
      _
    $region29: #{tpu_custom_call.1} parent=1 // pred_fallthru
      _
    // Predicated region
    $region30: #{tpu_custom_call.1} parent=1 // pred_check
      _
    $region31: #{tpu_custom_call.1} parent=1 // pred_check_branch
      %56 = sbr.rel (0) target = $region33
    $region32: #{tpu_custom_call.1} parent=1 // pred_region
      _
    $region33: #{tpu_custom_call.1} parent=1 // pred_fallthru
      _
    // Predicated region
    $region34: #{tpu_custom_call.1} parent=1 // pred_check
      _
    $region35: #{tpu_custom_call.1} parent=1 // pred_check_branch
      %58 = sbr.rel (0) target = $region37
    $region36: #{tpu_custom_call.1} parent=1 // pred_region
      _
    $region37: #{tpu_custom_call.1} parent=1 // pred_fallthru
      _
    // Predicated region
    $region38: #{tpu_custom_call.1} parent=1 // pred_check
      _
    $region39: #{tpu_custom_call.1} parent=1 // pred_check_branch
      %60 = sbr.rel (0) target = $region41
    $region40: #{tpu_custom_call.1} parent=1 // pred_region
      _
    $region41: #{tpu_custom_call.1} parent=1 // pred_fallthru
      _
    // Predicated region
    $region42: #{tpu_custom_call.1} parent=1 // pred_check
      _
    $region43: #{tpu_custom_call.1} parent=1 // pred_check_branch
      %62 = sbr.rel (0) target = $region45
    $region44: #{tpu_custom_call.1} parent=1 // pred_region
      _
    $region45: #{tpu_custom_call.1} parent=1 // pred_fallthru
      _
    // Predicated region
    $region46: #{tpu_custom_call.1} parent=1 // pred_check
      _
    $region47: #{tpu_custom_call.1} parent=1 // pred_check_branch
      %64 = sbr.rel (0) target = $region49
    $region48: #{tpu_custom_call.1} parent=1 // pred_region
      _
    $region49: #{tpu_custom_call.1} parent=1 // pred_fallthru
      _
    // Predicated region
    $region50: #{tpu_custom_call.1} parent=1 // pred_check
      _
    $region51: #{tpu_custom_call.1} parent=1 // pred_check_branch
      %66 = sbr.rel (0) target = $region53
    $region52: #{tpu_custom_call.1} parent=1 // pred_region
      %s68 = ssub.s32 3072, 3072
      %69 = vsyncadd [#allocation6], %s68
      %s70 = sshll.u32 [#allocation7], 4
      %s71 = int_to_ptr.vmem [resolvable:$true] %s70
      %76 = dma.hbm_to_vmem [thread:$0]  %s12, 3072, %s71, [#allocation6], 192, 192, 12
    $region53: #{tpu_custom_call.1} parent=1 // pred_fallthru
      _
    // Predicated region
    $region54: #{tpu_custom_call.1} parent=1 // pred_check
      _
    $region55: #{tpu_custom_call.1} parent=1 // pred_check_branch
      %78 = sbr.rel (0) target = $region57
    $region56: #{tpu_custom_call.1} parent=1 // pred_region
      _
    $region57: #{tpu_custom_call.1} parent=1 // pred_fallthru
      _
    // Predicated region
    $region58: #{tpu_custom_call.1} parent=1 // pred_check
      _
    $region59: #{tpu_custom_call.1} parent=1 // pred_check_branch
      %80 = sbr.rel (0) target = $region61
    $region60: #{tpu_custom_call.1} parent=1 // pred_region
      %81 = dma.done [#allocation3], 32
    $region61: #{tpu_custom_call.1} parent=1 // pred_fallthru
      _
    // Predicated region
    $region62: #{tpu_custom_call.1} parent=1 // pred_check
      _
    $region63: #{tpu_custom_call.1} parent=1 // pred_check_branch
      %83 = sbr.rel (0) target = $region65
    $region64: #{tpu_custom_call.1} parent=1 // pred_region
      %84 = dma.done [#allocation6], 32
    $region65: #{tpu_custom_call.1} parent=1 // pred_fallthru
      _
    // Predicated region
    $region66: #{tpu_custom_call.1} parent=1 // pred_check
      _
    $region67: #{tpu_custom_call.1} parent=1 // pred_check_branch
      %86 = sbr.rel (0) target = $region69
    $region68: #{tpu_custom_call.1} parent=1 // pred_region
      %87 = dma.done [#allocation6], 3072
    $region69: #{tpu_custom_call.1} parent=1 // pred_fallthru
      _
    %v89 = vld [vmem:[%s0] sm:$0x3]
    %v90 = vpack.c.bf16 %v89, %v89
    %v91 = vld [vmem:[%s4] sm:$0xf]
    %v92 = vld [vmem:[%s4 + $0x4] sm:$0xf]
    %v93 = vld [vmem:[%s4 + $0x8] sm:$0xf]
    %v94 = vld [vmem:[%s4 + $0xc] sm:$0xf]
    %v95 = vld [vmem:[%s4 + $0x10] sm:$0xf]
    %v96 = vld [vmem:[%s4 + $0x14] sm:$0xf]
    %v97 = vld [vmem:[%s4 + $0x18] sm:$0xf]
    %v98 = vld [vmem:[%s4 + $0x1c] sm:$0xf]
    %v99 = vld [vmem:[%s1] sm:$0xf]
    %v102 = vunpack.c.l.s4 1983009808
    %v103 = vunpack.c.0.s8 %v102
    %v104 = vlaneseq
    %v105 = vshrl.u32 %v104, 7
    %v106 = vsub.s32 %v103, %v105
    %v107 = vrot.slane %v99, %v106
    %v108 = vcombine.high %v107, %v107
    %v111 = vpack.c.bf16 %v107, %v107
    %v112 = vpack.c.bf16 %v108, %v108
    %v113 = vld [vmem:[%s5] sm:$0xf]
    %v114 = vld [vmem:[%s5 + $0x4] sm:$0xf]
    %v115 = vld [vmem:[%s5 + $0x8] sm:$0xf]
    %v116 = vld [vmem:[%s5 + $0xc] sm:$0xf]
    %v117 = vld [vmem:[%s5 + $0x10] sm:$0xf]
    %v118 = vld [vmem:[%s5 + $0x14] sm:$0xf]
    %v119 = vld [vmem:[%s5 + $0x18] sm:$0xf]
    %v120 = vld [vmem:[%s5 + $0x1c] sm:$0xf]
    %v121 = vld [vmem:[%s5 + $0x20] sm:$0xf]
    %v122 = vld [vmem:[%s5 + $0x24] sm:$0xf]
    %v123 = vld [vmem:[%s5 + $0x28] sm:$0xf]
    %v124 = vld [vmem:[%s5 + $0x2c] sm:$0xf]
    %v125 = vld [vmem:[%s5 + $0x30] sm:$0xf]
    %v126 = vld [vmem:[%s5 + $0x34] sm:$0xf]
    %v127 = vld [vmem:[%s5 + $0x38] sm:$0xf]
    %v128 = vld [vmem:[%s5 + $0x3c] sm:$0xf]
    %v129 = vld [vmem:[%s5 + $0x40] sm:$0xf]
    %v130 = vld [vmem:[%s5 + $0x44] sm:$0xf]
    %v131 = vld [vmem:[%s5 + $0x48] sm:$0xf]
    %v132 = vld [vmem:[%s5 + $0x4c] sm:$0xf]
    %v133 = vld [vmem:[%s5 + $0x50] sm:$0xf]
    %v134 = vld [vmem:[%s5 + $0x54] sm:$0xf]
    %v135 = vld [vmem:[%s5 + $0x58] sm:$0xf]
    %v136 = vld [vmem:[%s5 + $0x5c] sm:$0xf]
    %v161 = vunpack.c.l.b16 %v113
    %v162 = vunpack.c.l.b16 %v114
    %v163 = vunpack.c.l.b16 %v115
    %v164 = vunpack.c.l.b16 %v116
    %v165 = vunpack.c.l.b16 %v117
    %v166 = vunpack.c.l.b16 %v118
    %v167 = vunpack.c.l.b16 %v119
    %v168 = vunpack.c.l.b16 %v120
    %v169 = vunpack.c.l.b16 %v121
    %v170 = vunpack.c.l.b16 %v122
    %v171 = vunpack.c.l.b16 %v123
    %v172 = vunpack.c.l.b16 %v124
    %v173 = vunpack.c.l.b16 %v125
    %v174 = vunpack.c.l.b16 %v126
    %v175 = vunpack.c.l.b16 %v127
    %v176 = vunpack.c.l.b16 %v128
    %v177 = vunpack.c.l.b16 %v129
    %v178 = vunpack.c.l.b16 %v130
    %v179 = vunpack.c.l.b16 %v131
    %v180 = vunpack.c.l.b16 %v132
    %v181 = vunpack.c.l.b16 %v133
    %v182 = vunpack.c.l.b16 %v134
    %v183 = vunpack.c.l.b16 %v135
    %v184 = vunpack.c.l.b16 %v136
    %v185 = vpack.c.b16 %v162, %v161
    %v186 = vpack.c.b16 %v164, %v163
    %v187 = vpack.c.b16 %v166, %v165
    %v188 = vpack.c.b16 %v168, %v167
    %v189 = vpack.c.b16 %v170, %v169
    %v190 = vpack.c.b16 %v172, %v171
    %v191 = vpack.c.b16 %v174, %v173
    %v192 = vpack.c.b16 %v176, %v175
    %v193 = vpack.c.b16 %v178, %v177
    %v194 = vpack.c.b16 %v180, %v179
    %v195 = vpack.c.b16 %v182, %v181
    %v196 = vpack.c.b16 %v184, %v183
    %vm209 = vcmask 523264
    %v211 = vsel %vm209, %v112, 0
    %213 = vmatprep.subr.bf16.mxu0 0
    %214 = vmatpush1.bf16.msra.mxu0 %v185
    %215 = vmatprep.subr.bf16.mxu0 0
    %216 = vmatpush1.bf16.msra.mxu0 %v186
    %217 = vmatprep.subr.bf16.mxu0 0
    %218 = vmatpush1.bf16.msra.mxu0 %v187
    %219 = vmatprep.subr.bf16.mxu0 0
    %220 = vmatpush1.bf16.msra.mxu0 %v188
    %221 = vmatprep.subr.bf16.mxu0 0
    %222 = vmatpush1.bf16.msra.mxu0 %v189
    %223 = vmatprep.subr.bf16.mxu0 0
    %224 = vmatpush1.bf16.msra.mxu0 %v190
    %225 = vmatprep.subr.bf16.mxu0 0
    %226 = vmatpush1.bf16.msra.mxu0 %v191
    %227 = vmatprep.subr.bf16.mxu0 0
    %228 = vmatpush1.bf16.msra.mxu0 %v192
    %229 = vmatprep.subr.bf16.mxu0 0
    %230 = vmatpush1.bf16.msra.mxu0 %v193
    %231 = vmatprep.subr.bf16.mxu0 0
    %232 = vmatpush1.bf16.msra.mxu0 %v194
    %233 = vmatprep.subr.bf16.mxu0 0
    %234 = vmatpush1.bf16.msra.mxu0 %v195
    %235 = vmatprep.subr.bf16.mxu0 0
    %236 = vmatpush1.bf16.msra.mxu0 %v196
    %237 = vmatprep.subr.bf16.mxu0 0
    %238 = vmatpush1.bf16.msra.mxu0 0
    %239 = vmatprep.subr.bf16.mxu0 0
    %240 = vmatpush1.bf16.msra.mxu0 0
    %241 = vmatprep.subr.bf16.mxu0 0
    %242 = vmatpush1.bf16.msra.mxu0 0
    %243 = vmatprep.subr.bf16.mxu0 0
    %244 = vmatpush1.bf16.msra.mxu0 0
    %245 = vmatprep.mubr.bf16.mxu0 %v211
    %246 = vmatmul.mubr.bf16.gmra.mrb[0].mxu0 %v111
    %v247 = vpop.f32.mrb[0].mxu0
    %v248 = vadd.f32 0.0, %v247
    %v249 = vpop.f32.mrb[0].mxu0
    %v250 = vpop.f32.mrb[0].mxu0
    %v251 = vpop.f32.mrb[0].mxu0
    %252 = vdwg.mxu0
    %v261 = vunpack.c.l.b16 %v91
    %v262 = vunpack.c.l.b16 %v92
    %v263 = vunpack.c.l.b16 %v93
    %v264 = vunpack.c.l.b16 %v94
    %v265 = vunpack.c.l.b16 %v95
    %v266 = vunpack.c.l.b16 %v96
    %v267 = vunpack.c.l.b16 %v97
    %v268 = vunpack.c.l.b16 %v98
    %v269 = vpack.c.b16 %v262, %v261
    %v270 = vpack.c.b16 %v264, %v263
    %v271 = vpack.c.b16 %v266, %v265
    %v272 = vpack.c.b16 %v268, %v267
    %v278 = vsel %vm209, %v90, 0
    %280 = vmatprep.subr.bf16.mxu0 0
    %281 = vmatpush1.bf16.msra.mxu0 %v269
    %282 = vmatprep.subr.bf16.mxu0 0
    %283 = vmatpush1.bf16.msra.mxu0 %v270
    %284 = vmatprep.subr.bf16.mxu0 0
    %285 = vmatpush1.bf16.msra.mxu0 %v271
    %286 = vmatprep.subr.bf16.mxu0 0
    %287 = vmatpush1.bf16.msra.mxu0 %v272
    %288 = vmatprep.subr.bf16.mxu0 0
    %289 = vmatpush1.bf16.msra.mxu0 0
    %290 = vmatprep.subr.bf16.mxu0 0
    %291 = vmatpush1.bf16.msra.mxu0 0
    %292 = vmatprep.subr.bf16.mxu0 0
    %293 = vmatpush1.bf16.msra.mxu0 0
    %294 = vmatprep.subr.bf16.mxu0 0
    %295 = vmatpush1.bf16.msra.mxu0 0
    %296 = vmatprep.subr.bf16.mxu0 0
    %297 = vmatpush1.bf16.msra.mxu0 0
    %298 = vmatprep.subr.bf16.mxu0 0
    %299 = vmatpush1.bf16.msra.mxu0 0
    %300 = vmatprep.subr.bf16.mxu0 0
    %301 = vmatpush1.bf16.msra.mxu0 0
    %302 = vmatprep.subr.bf16.mxu0 0
    %303 = vmatpush1.bf16.msra.mxu0 0
    %304 = vmatprep.subr.bf16.mxu0 0
    %305 = vmatpush1.bf16.msra.mxu0 0
    %306 = vmatprep.subr.bf16.mxu0 0
    %307 = vmatpush1.bf16.msra.mxu0 0
    %308 = vmatprep.subr.bf16.mxu0 0
    %309 = vmatpush1.bf16.msra.mxu0 0
    %310 = vmatprep.subr.bf16.mxu0 0
    %311 = vmatpush1.bf16.msra.mxu0 0
    %312 = vmatprep.mubr.bf16.mxu0 0
    %313 = vmatmul.mubr.bf16.gmra.mrb[0].mxu0 %v278
    %v314 = vpop.f32.mrb[0].mxu0
    %v315 = vadd.f32 %v248, %v314
    %v316 = vpop.f32.mrb[0].mxu0
    %v317 = vpop.f32.mrb[0].mxu0
    %v318 = vpop.f32.mrb[0].mxu0
    %319 = vdwg.mxu0
    %v320 = vld [vmem:[#allocation2] sm:$0x3]
    %v321 = vpack.c.bf16 %v320, %v320
    %v322 = vld [vmem:[%s6] sm:$0xf]
    %v323 = vld [vmem:[%s6 + $0x4] sm:$0xf]
    %v324 = vld [vmem:[%s6 + $0x8] sm:$0xf]
    %v325 = vld [vmem:[%s6 + $0xc] sm:$0xf]
    %v330 = vunpack.c.l.b16 %v322
    %v331 = vunpack.c.l.b16 %v323
    %v332 = vunpack.c.l.b16 %v324
    %v333 = vunpack.c.l.b16 %v325
    %v334 = vpack.c.b16 %v331, %v330
    %v335 = vpack.c.b16 %v333, %v332
    %vm338 = vcmask 261120
    %v340 = vsel %vm338, %v321, 0
    %342 = vmatprep.subr.bf16.mxu0 0
    %343 = vmatpush1.bf16.msra.mxu0 %v334
    %344 = vmatprep.subr.bf16.mxu0 0
    %345 = vmatpush1.bf16.msra.mxu0 %v335
    %346 = vmatprep.subr.bf16.mxu0 0
    %347 = vmatpush1.bf16.msra.mxu0 0
    %348 = vmatprep.subr.bf16.mxu0 0
    %349 = vmatpush1.bf16.msra.mxu0 0
    %350 = vmatprep.subr.bf16.mxu0 0
    %351 = vmatpush1.bf16.msra.mxu0 0
    %352 = vmatprep.subr.bf16.mxu0 0
    %353 = vmatpush1.bf16.msra.mxu0 0
    %354 = vmatprep.subr.bf16.mxu0 0
    %355 = vmatpush1.bf16.msra.mxu0 0
    %356 = vmatprep.subr.bf16.mxu0 0
    %357 = vmatpush1.bf16.msra.mxu0 0
    %358 = vmatprep.subr.bf16.mxu0 0
    %359 = vmatpush1.bf16.msra.mxu0 0
    %360 = vmatprep.subr.bf16.mxu0 0
    %361 = vmatpush1.bf16.msra.mxu0 0
    %362 = vmatprep.subr.bf16.mxu0 0
    %363 = vmatpush1.bf16.msra.mxu0 0
    %364 = vmatprep.subr.bf16.mxu0 0
    %365 = vmatpush1.bf16.msra.mxu0 0
    %366 = vmatprep.subr.bf16.mxu0 0
    %367 = vmatpush1.bf16.msra.mxu0 0
    %368 = vmatprep.subr.bf16.mxu0 0
    %369 = vmatpush1.bf16.msra.mxu0 0
    %370 = vmatprep.subr.bf16.mxu0 0
    %371 = vmatpush1.bf16.msra.mxu0 0
    %372 = vmatprep.subr.bf16.mxu0 0
    %373 = vmatpush1.bf16.msra.mxu0 0
    %374 = vmatprep.mubr.bf16.mxu0 0
    %375 = vmatmul.mubr.bf16.gmra.mrb[0].mxu0 %v340
    %v376 = vpop.f32.mrb[0].mxu0
    %v377 = vadd.f32 0.0, %v376
    %v378 = vpop.f32.mrb[0].mxu0
    %v379 = vpop.f32.mrb[0].mxu0
    %v380 = vpop.f32.mrb[0].mxu0
    %381 = vdwg.mxu0
    %v382 = vadd.f32 %v315, %v377
    %v383 = vld [vmem:[%s7] sm:$0x1]
    %v385 = vlaneseq
    %v386 = vshrl.u32 %v385, 7
    %v387 = vsub.s32 0, %v386
    %v388 = vrot.slane %v383, %v387
    %v390 = vadd.f32 %v382, %v388
    %v391 = vmax.f32 %v390, 0.0
    %v392 = vld [vmem:[%s8] sm:$0xff]
    %v393 = vld [vmem:[%s8 + $0x8] sm:$0xff]
    %v394 = vld [vmem:[%s8 + $0x10] sm:$0xff]
    %v395 = vld [vmem:[%s8 + $0x18] sm:$0xff]
    %v396 = vld [vmem:[%s8 + $0x20] sm:$0xff]
    %v397 = vld [vmem:[%s8 + $0x28] sm:$0xff]
    %v398 = vld [vmem:[%s8 + $0x30] sm:$0xff]
    %v399 = vld [vmem:[%s8 + $0x38] sm:$0xff]
    %v400 = vld [vmem:[%s8 + $0x40] sm:$0xff]
    %v401 = vld [vmem:[%s8 + $0x48] sm:$0xff]
    %v402 = vld [vmem:[%s8 + $0x50] sm:$0xff]
    %v403 = vld [vmem:[%s8 + $0x58] sm:$0xff]
    %v404 = vld [vmem:[%s8 + $0x60] sm:$0xff]
    %v405 = vld [vmem:[%s8 + $0x68] sm:$0xff]
    %v406 = vld [vmem:[%s8 + $0x70] sm:$0xff]
    %v407 = vld [vmem:[%s8 + $0x78] sm:$0xff]
    %v408 = vld [vmem:[%s9] sm:$0x1]
    %v410 = vlaneseq
    %v411 = vshrl.u32 %v410, 7
    %v412 = vsub.s32 0, %v411
    %v413 = vrot.slane %v408, %v412
    %415 = vmatprep.subr.mxu0 0.0
    %416 = vmatpush1.msra.mxu0 %v392
    %417 = vmatprep.subr.mxu0 0.0
    %418 = vmatpush1.msra.mxu0 %v393
    %419 = vmatprep.subr.mxu0 0.0
    %420 = vmatpush1.msra.mxu0 %v394
    %421 = vmatprep.subr.mxu0 0.0
    %422 = vmatpush1.msra.mxu0 %v395
    %423 = vmatprep.subr.mxu0 0.0
    %424 = vmatpush1.msra.mxu0 %v396
    %425 = vmatprep.subr.mxu0 0.0
    %426 = vmatpush1.msra.mxu0 %v397
    %427 = vmatprep.subr.mxu0 0.0
    %428 = vmatpush1.msra.mxu0 %v398
    %429 = vmatprep.subr.mxu0 0.0
    %430 = vmatpush1.msra.mxu0 %v399
    %431 = vmatprep.subr.mxu0 0.0
    %432 = vmatpush1.msra.mxu0 %v400
    %433 = vmatprep.subr.mxu0 0.0
    %434 = vmatpush1.msra.mxu0 %v401
    %435 = vmatprep.subr.mxu0 0.0
    %436 = vmatpush1.msra.mxu0 %v402
    %437 = vmatprep.subr.mxu0 0.0
    %438 = vmatpush1.msra.mxu0 %v403
    %439 = vmatprep.subr.mxu0 0.0
    %440 = vmatpush1.msra.mxu0 %v404
    %441 = vmatprep.subr.mxu0 0.0
    %442 = vmatpush1.msra.mxu0 %v405
    %443 = vmatprep.subr.mxu0 0.0
    %444 = vmatpush1.msra.mxu0 %v406
    %445 = vmatprep.subr.mxu0 0.0
    %446 = vmatpush1.msra.mxu0 %v407
    %447 = vmatprep.subr.mxu0 0.0
    %448 = vmatpush1.msra.mxu0 0.0
    %449 = vmatprep.subr.mxu0 0.0
    %450 = vmatpush1.msra.mxu0 0.0
    %451 = vmatprep.subr.mxu0 0.0
    %452 = vmatpush1.msra.mxu0 0.0
    %453 = vmatprep.subr.mxu0 0.0
    %454 = vmatpush1.msra.mxu0 0.0
    %455 = vmatprep.subr.mxu0 0.0
    %456 = vmatpush1.msra.mxu0 0.0
    %457 = vmatprep.subr.mxu0 0.0
    %458 = vmatpush1.msra.mxu0 0.0
    %459 = vmatprep.subr.mxu0 0.0
    %460 = vmatpush1.msra.mxu0 0.0
    %461 = vmatprep.subr.mxu0 0.0
    %462 = vmatpush1.msra.mxu0 0.0
    %463 = vmatprep.subr.mxu0 0.0
    %464 = vmatpush1.msra.mxu0 0.0
    %465 = vmatprep.subr.mxu0 0.0
    %466 = vmatpush1.msra.mxu0 0.0
    %467 = vmatprep.subr.mxu0 0.0
    %468 = vmatpush1.msra.mxu0 0.0
    %469 = vmatprep.subr.mxu0 0.0
    %470 = vmatpush1.msra.mxu0 0.0
    %471 = vmatprep.subr.mxu0 0.0
    %472 = vmatpush1.msra.mxu0 0.0
    %473 = vmatprep.subr.mxu0 0.0
    %474 = vmatpush1.msra.mxu0 0.0
    %475 = vmatprep.subr.mxu0 0.0
    %476 = vmatpush1.msra.mxu0 0.0
    %477 = vmatprep.subr.mxu0 0.0
    %478 = vmatpush1.msra.mxu0 0.0
    %479 = vmatprep.mubr.f32.mxu0 0.0
    %480 = vmatmul.mubr.f32.gmra.mrb[0].mxu0 %v391
    %v481 = vpop.f32.mrb[0].mxu0
    %v482 = vadd.f32 %v413, %v481
    %v483 = vpop.f32.mrb[0].mxu0
    %484 = vdwg.mxu0
    %v485 = vld [vmem:[#allocation5] sm:$0x3]
    %v486 = vmul.f32 %v482, 0.5
    %v487 = vmul.f32 %v486, 1.442695
    %v488 = vpow.pop %v487
    %490 = vrot.lane.b32.xlu0 %v488, 126
    %v491 = vpop.permute.xlu0 %490
    %v493 = vmul.f32 %v485, %v491
    %v494 = vadd.f32 %v493, %v482
    %v495 = vld [vmem:[%s10] sm:$0x3]
    %497 = vset.pattern.permute.xlu0 0
    %498 = vperm.xlu0 %497, %v494
    %v499 = vpop.permute.xlu0 %498
    %v501 = vlaneseq
    %v502 = vshrl.u32 %v501, 7
    %v503 = vsub.s32 0, %v502
    %v504 = vrot.slane %v495, %v503
    %v505 = vmul.f32 %v499, %v504
    %506 = vset.pattern.permute.xlu0 1
    %507 = vperm.xlu0 %506, %v494
    %v508 = vpop.permute.xlu0 %507
    %v510 = vlaneseq
    %v511 = vshrl.u32 %v510, 7
    %v512 = vsub.s32 1, %v511
    %v513 = vrot.slane %v495, %v512
    %v514 = vmul.f32 %v508, %v513
    %v515 = vadd.f32 %v505, %v514
    %v516 = vld [vmem:[%s11] sm:$0x1]
    %v518 = vlaneseq
    %v519 = vshrl.u32 %v518, 7
    %v520 = vsub.s32 0, %v519
    %v521 = vrot.slane %v516, %v520
    %v523 = vadd.f32 %v515, %v521
    %v524 = vmax.f32 %v523, 0.0
    %v525 = vpack.c.bf16 %v524, %v524
    %v526 = vld [vmem:[#allocation7] sm:$0xff]
    %v527 = vld [vmem:[#allocation7 + $0x8] sm:$0xf]
    %v528 = vld [vmem:[#allocation7 + $0xc] sm:$0xff]
    %v529 = vld [vmem:[#allocation7 + $0x14] sm:$0xf]
    %v530 = vld [vmem:[#allocation7 + $0x18] sm:$0xff]
    %v531 = vld [vmem:[#allocation7 + $0x20] sm:$0xf]
    %v532 = vld [vmem:[#allocation7 + $0x24] sm:$0xff]
    %v533 = vld [vmem:[#allocation7 + $0x2c] sm:$0xf]
    %v534 = vld [vmem:[#allocation7 + $0x30] sm:$0xff]
    %v535 = vld [vmem:[#allocation7 + $0x38] sm:$0xf]
    %v536 = vld [vmem:[#allocation7 + $0x3c] sm:$0xff]
    %v537 = vld [vmem:[#allocation7 + $0x44] sm:$0xf]
    %v538 = vld [vmem:[#allocation7 + $0x48] sm:$0xff]
    %v539 = vld [vmem:[#allocation7 + $0x50] sm:$0xf]
    %v540 = vld [vmem:[#allocation7 + $0x54] sm:$0xff]
    %v541 = vld [vmem:[#allocation7 + $0x5c] sm:$0xf]
    %v542 = vld [vmem:[#allocation7 + $0x60] sm:$0xff]
    %v543 = vld [vmem:[#allocation7 + $0x68] sm:$0xf]
    %v544 = vld [vmem:[#allocation7 + $0x6c] sm:$0xff]
    %v545 = vld [vmem:[#allocation7 + $0x74] sm:$0xf]
    %v546 = vld [vmem:[#allocation7 + $0x78] sm:$0xff]
    %v547 = vld [vmem:[#allocation7 + $0x80] sm:$0xf]
    %v548 = vld [vmem:[#allocation7 + $0x84] sm:$0xff]
    %v549 = vld [vmem:[#allocation7 + $0x8c] sm:$0xf]
    %v550 = vld [vmem:[#allocation7 + $0x90] sm:$0xff]
    %v551 = vld [vmem:[#allocation7 + $0x98] sm:$0xf]
    %v552 = vld [vmem:[#allocation7 + $0x9c] sm:$0xff]
    %v553 = vld [vmem:[#allocation7 + $0xa4] sm:$0xf]
    %v554 = vld [vmem:[#allocation7 + $0xa8] sm:$0xff]
    %v555 = vld [vmem:[#allocation7 + $0xb0] sm:$0xf]
    %v556 = vld [vmem:[#allocation7 + $0xb4] sm:$0xff]
    %v557 = vld [vmem:[#allocation7 + $0xbc] sm:$0xf]
    %v558 = vld [vmem:[%s13] sm:$0x7]
    %v560 = vlaneseq
    %v561 = vshrl.u32 %v560, 7
    %v562 = vsub.s32 0, %v561
    %v563 = vrot.slane %v558, %v562
    %v564 = vlaneseq
    %v565 = vshrl.u32 %v564, 7
    %v566 = vsub.s32 1, %v565
    %v567 = vrot.slane %v558, %v566
    %v568 = vlaneseq
    %v569 = vshrl.u32 %v568, 7
    %v570 = vsub.s32 2, %v569
    %v571 = vrot.slane %v558, %v570
    %v607 = vunpack.c.l.b16 %v526
    %v608 = vunpack.c.h.b16 %v526
    %v609 = vunpack.c.l.b16 %v527
    %v610 = vunpack.c.l.b16 %v528
    %v611 = vunpack.c.h.b16 %v528
    %v612 = vunpack.c.l.b16 %v529
    %v613 = vunpack.c.l.b16 %v530
    %v614 = vunpack.c.h.b16 %v530
    %v615 = vunpack.c.l.b16 %v531
    %v616 = vunpack.c.l.b16 %v532
    %v617 = vunpack.c.h.b16 %v532
    %v618 = vunpack.c.l.b16 %v533
    %v619 = vunpack.c.l.b16 %v534
    %v620 = vunpack.c.h.b16 %v534
    %v621 = vunpack.c.l.b16 %v535
    %v622 = vunpack.c.l.b16 %v536
    %v623 = vunpack.c.h.b16 %v536
    %v624 = vunpack.c.l.b16 %v537
    %v625 = vunpack.c.l.b16 %v538
    %v626 = vunpack.c.h.b16 %v538
    %v627 = vunpack.c.l.b16 %v539
    %v628 = vunpack.c.l.b16 %v540
    %v629 = vunpack.c.h.b16 %v540
    %v630 = vunpack.c.l.b16 %v541
    %v631 = vunpack.c.l.b16 %v542
    %v632 = vunpack.c.h.b16 %v542
    %v633 = vunpack.c.l.b16 %v543
    %v634 = vunpack.c.l.b16 %v544
    %v635 = vunpack.c.h.b16 %v544
    %v636 = vunpack.c.l.b16 %v545
    %v637 = vunpack.c.l.b16 %v546
    %v638 = vunpack.c.h.b16 %v546
    %v639 = vunpack.c.l.b16 %v547
    %v640 = vunpack.c.l.b16 %v548
    %v641 = vunpack.c.h.b16 %v548
    %v642 = vunpack.c.l.b16 %v549
    %v643 = vunpack.c.l.b16 %v550
    %v644 = vunpack.c.h.b16 %v550
    %v645 = vunpack.c.l.b16 %v551
    %v646 = vunpack.c.l.b16 %v552
    %v647 = vunpack.c.h.b16 %v552
    %v648 = vunpack.c.l.b16 %v553
    %v649 = vunpack.c.l.b16 %v554
    %v650 = vunpack.c.h.b16 %v554
    %v651 = vunpack.c.l.b16 %v555
    %v652 = vunpack.c.l.b16 %v556
    %v653 = vunpack.c.h.b16 %v556
    %v654 = vunpack.c.l.b16 %v557
    %v655 = vpack.c.b16 %v610, %v607
    %v656 = vpack.c.b16 %v611, %v608
    %v657 = vpack.c.b16 %v612, %v609
    %v658 = vpack.c.b16 %v616, %v613
    %v659 = vpack.c.b16 %v617, %v614
    %v660 = vpack.c.b16 %v618, %v615
    %v661 = vpack.c.b16 %v622, %v619
    %v662 = vpack.c.b16 %v623, %v620
    %v663 = vpack.c.b16 %v624, %v621
    %v664 = vpack.c.b16 %v628, %v625
    %v665 = vpack.c.b16 %v629, %v626
    %v666 = vpack.c.b16 %v630, %v627
    %v667 = vpack.c.b16 %v634, %v631
    %v668 = vpack.c.b16 %v635, %v632
    %v669 = vpack.c.b16 %v636, %v633
    %v670 = vpack.c.b16 %v640, %v637
    %v671 = vpack.c.b16 %v641, %v638
    %v672 = vpack.c.b16 %v642, %v639
    %v673 = vpack.c.b16 %v646, %v643
    %v674 = vpack.c.b16 %v647, %v644
    %v675 = vpack.c.b16 %v648, %v645
    %v676 = vpack.c.b16 %v652, %v649
    %v677 = vpack.c.b16 %v653, %v650
    %v678 = vpack.c.b16 %v654, %v651
    %703 = vmatprep.subr.bf16.mxu0 %v656
    %704 = vmatpush1.bf16.msra.mxu0 %v655
    %705 = vmatprep.subr.bf16.mxu0 %v659
    %706 = vmatpush1.bf16.msra.mxu0 %v658
    %707 = vmatprep.subr.bf16.mxu0 %v662
    %708 = vmatpush1.bf16.msra.mxu0 %v661
    %709 = vmatprep.subr.bf16.mxu0 %v665
    %710 = vmatpush1.bf16.msra.mxu0 %v664
    %711 = vmatprep.subr.bf16.mxu0 %v668
    %712 = vmatpush1.bf16.msra.mxu0 %v667
    %713 = vmatprep.subr.bf16.mxu0 %v671
    %714 = vmatpush1.bf16.msra.mxu0 %v670
    %715 = vmatprep.subr.bf16.mxu0 %v674
    %716 = vmatpush1.bf16.msra.mxu0 %v673
    %717 = vmatprep.subr.bf16.mxu0 %v677
    %718 = vmatpush1.bf16.msra.mxu0 %v676
    %719 = vmatprep.subr.bf16.mxu0 0
    %720 = vmatpush1.bf16.msra.mxu0 0
    %721 = vmatprep.subr.bf16.mxu0 0
    %722 = vmatpush1.bf16.msra.mxu0 0
    %723 = vmatprep.subr.bf16.mxu0 0
    %724 = vmatpush1.bf16.msra.mxu0 0
    %725 = vmatprep.subr.bf16.mxu0 0
    %726 = vmatpush1.bf16.msra.mxu0 0
    %727 = vmatprep.subr.bf16.mxu0 0
    %728 = vmatpush1.bf16.msra.mxu0 0
    %729 = vmatprep.subr.bf16.mxu0 0
    %730 = vmatpush1.bf16.msra.mxu0 0
    %731 = vmatprep.subr.bf16.mxu0 0
    %732 = vmatpush1.bf16.msra.mxu0 0
    %733 = vmatprep.subr.bf16.mxu0 0
    %734 = vmatpush1.bf16.msra.mxu0 0
    %735 = vmatprep.mubr.bf16.mxu0 0
    %736 = vmatmul.mubr.bf16.gmra.mrb[0].mxu0 %v525
    %v737 = vpop.f32.mrb[0].mxu0
    %v738 = vadd.f32 %v563, %v737
    %v739 = vpop.f32.mrb[0].mxu0
    %v740 = vadd.f32 %v567, %v739
    %v741 = vpop.f32.mrb[0].mxu0
    %v742 = vpop.f32.mrb[0].mxu0
    %743 = vdwg.mxu0
    %744 = vmatprep.subr.bf16.mxu0 0
    %745 = vmatpush1.bf16.msra.mxu0 %v657
    %746 = vmatprep.subr.bf16.mxu0 0
    %747 = vmatpush1.bf16.msra.mxu0 %v660
    %748 = vmatprep.subr.bf16.mxu0 0
    %749 = vmatpush1.bf16.msra.mxu0 %v663
    %750 = vmatprep.subr.bf16.mxu0 0
    %751 = vmatpush1.bf16.msra.mxu0 %v666
    %752 = vmatprep.subr.bf16.mxu0 0
    %753 = vmatpush1.bf16.msra.mxu0 %v669
    %754 = vmatprep.subr.bf16.mxu0 0
    %755 = vmatpush1.bf16.msra.mxu0 %v672
    %756 = vmatprep.subr.bf16.mxu0 0
    %757 = vmatpush1.bf16.msra.mxu0 %v675
    %758 = vmatprep.subr.bf16.mxu0 0
    %759 = vmatpush1.bf16.msra.mxu0 %v678
    %760 = vmatprep.subr.bf16.mxu0 0
    %761 = vmatpush1.bf16.msra.mxu0 0
    %762 = vmatprep.subr.bf16.mxu0 0
    %763 = vmatpush1.bf16.msra.mxu0 0
    %764 = vmatprep.subr.bf16.mxu0 0
    %765 = vmatpush1.bf16.msra.mxu0 0
    %766 = vmatprep.subr.bf16.mxu0 0
    %767 = vmatpush1.bf16.msra.mxu0 0
    %768 = vmatprep.subr.bf16.mxu0 0
    %769 = vmatpush1.bf16.msra.mxu0 0
    %770 = vmatprep.subr.bf16.mxu0 0
    %771 = vmatpush1.bf16.msra.mxu0 0
    %772 = vmatprep.subr.bf16.mxu0 0
    %773 = vmatpush1.bf16.msra.mxu0 0
    %774 = vmatprep.subr.bf16.mxu0 0
    %775 = vmatpush1.bf16.msra.mxu0 0
    %776 = vmatprep.mubr.bf16.mxu0 0
    %777 = vmatmul.mubr.bf16.gmra.mrb[0].mxu0 %v525
    %v778 = vpop.f32.mrb[0].mxu0
    %v779 = vadd.f32 %v571, %v778
    %v780 = vpop.f32.mrb[0].mxu0
    %v781 = vpop.f32.mrb[0].mxu0
    %v782 = vpop.f32.mrb[0].mxu0
    %783 = vdwg.mxu0
    %v784 = vpack.c.bf16 %v738, %v738
    %v785 = vpack.c.bf16 %v740, %v740
    %v786 = vpack.c.bf16 %v779, %v779
    %v790 = vcombine.low %v784, %v785
    %v792 = vunpack.c.l.s4 1966171168
    %v793 = vunpack.c.0.s8 %v792
    %v794 = vlaneseq
    %v795 = vshrl.u32 %v794, 7
    %v796 = vsub.s32 %v793, %v795
    %v797 = vrot.slane %v790, %v796
    %v799 = vunpack.c.l.s4 1966171168
    %v800 = vunpack.c.0.s8 %v799
    %v801 = vlaneseq
    %v802 = vshrl.u32 %v801, 7
    %v803 = vsub.s32 %v800, %v802
    %v804 = vrot.slane %v786, %v803
    %v805 = vcombine.low %v797, %v804
    %v807 = vunpack.c.l.s4 1966171168
    %v808 = vunpack.c.0.s8 %v807
    %v809 = vlaneseq
    %v810 = vshrl.u32 %v809, 7
    %v811 = vsub.s32 %v808, %v810
    %v812 = vrot.slane %v805, %v811
    %814 = vst [vmem:[#allocation8] sm:$0x7] %v812
    %vm815 = vcmask 25600
    %816 = vst.msk [vmem:[#allocation9] sm:$0x3] %vm815, %v482
    // Predicated region
    $region70: #{tpu_custom_call.1} parent=1 // pred_check
      _
    $region71: #{tpu_custom_call.1} parent=1 // pred_check_branch
      %818 = sbr.rel (0) target = $region73
    $region72: #{tpu_custom_call.1} parent=1 // pred_region
      %s820 = ssub.s32 48, 48
      %821 = vsyncadd [#allocation4], %s820
      %s823 = sshll.u32 [#allocation8], 4
      %s824 = int_to_ptr.vmem [resolvable:$true] %s823
      %826 = dma.vmem_to_hbm [thread:$0]  %s824, 48, %s14, [#allocation4]
    $region73: #{tpu_custom_call.1} parent=1 // pred_fallthru
      _
    // Predicated region
    $region74: #{tpu_custom_call.1} parent=1 // pred_check
      _
    $region75: #{tpu_custom_call.1} parent=1 // pred_check_branch
      %828 = sbr.rel (0) target = $region77
    $region76: #{tpu_custom_call.1} parent=1 // pred_region
      %s830 = ssub.s32 32, 32
      %831 = vsyncadd [#allocation10], %s830
      %s833 = sshll.u32 [#allocation9], 4
      %s834 = int_to_ptr.vmem [resolvable:$true] %s833
      %836 = dma.vmem_to_hbm [thread:$0]  %s834, 32, %s15, [#allocation10]
    $region77: #{tpu_custom_call.1} parent=1 // pred_fallthru
      _
    // Predicated region
    $region78: #{tpu_custom_call.1} parent=1 // pred_check
      _
    $region79: #{tpu_custom_call.1} parent=1 // pred_check_branch
      %838 = sbr.rel (0) target = $region81
    $region80: #{tpu_custom_call.1} parent=1 // pred_region
      %839 = dma.done [#allocation4], 48
    $region81: #{tpu_custom_call.1} parent=1 // pred_fallthru
      _
    // Predicated region
    $region82: #{tpu_custom_call.1} parent=1 // pred_check
      _
    $region83: #{tpu_custom_call.1} parent=1 // pred_check_branch
      %841 = sbr.rel (0) target = $region85
    $region84: #{tpu_custom_call.1} parent=1 // pred_region
      %842 = dma.done [#allocation10], 32
    $region85: #{tpu_custom_call.1} parent=1 // pred_fallthru
      _
    %843 = vsyncpa [#allocation3], 1
    %844 = vsyncpa [#allocation6], 1
    %845 = vsyncpa [#allocation4], 1
    %846 = vsyncpa [#allocation10], 1

</llo_original>
